<compile_context>
chip_gen: v5e
topology: v5e:2x2
jax: 0.10.0
libtpu: 0.0.40
codegen_flags: <defaults>
</compile_context>

<pallas_src>
import functools

import jax
import jax.numpy as jnp
from jax import lax
from jax.experimental import pallas as pl
from jax.experimental.pallas import tpu as pltpu


def _round_up(a: int, b: int) -> int:
    return ((a + b - 1) // b) * b


def _vmem_capacity_bytes() -> int:
    """Per-core VMEM capacity; conservative (v7x) fallback if unavailable."""
    try:
        cap = int(getattr(pltpu.get_tpu_info(), "vmem_capacity_bytes", 0))
        if cap > 0:
            return cap
    except Exception:
        pass
    return 64 << 20


def _vmem_limit(tile_bytes: int, cap: int) -> int:
    limit = 2 * tile_bytes + (4 << 20)          # double-buffered x + w/out/slack
    limit = max(limit, 16 << 20)                # at least the smallest scoped default
    return int(min(limit, max(cap - (8 << 20), 16 << 20)))  # headroom below physical


# ---------------------------------------------------------------------------
# Kernel (shared by both paths)
# ---------------------------------------------------------------------------

def _gem_heat_kernel(w_ref, x_ref, o_ref, *, compute_dtype=None):
    """out(P, t) = w(P, L) . x(t, L)^T  on the MXU, f32 accumulation.

    General path:  P = 1,  L = D           (one weight row)
    Packed  path:  P = R,  L = R*D         (block-"diagonal" weight rows; R
                                             original rows packed per vector row)
    Output is lane-dense: the row index lands on the 128-lane axis.
    """
    w = w_ref[...]
    x = x_ref[...]
    if compute_dtype is not None:
        w = w.astype(compute_dtype)
        x = x.astype(compute_dtype)
    y = lax.dot_general(
        w, x,
        dimension_numbers=(((1,), (1,)), ((), ())),
        preferred_element_type=jnp.float32)
    o_ref[...] = y.astype(o_ref.dtype)


# ---------------------------------------------------------------------------
# Wrapper
# ---------------------------------------------------------------------------

def gem_heat(x, p, *, rows_per_tile=None, compute_dtype=None):
    """x: (B, C, D), p: (D,) -> (B, C).  Matches Gem_heat.forward (eps unused).

    rows_per_tile: optional cap on kernel-view rows per grid step (testing /
                   tuning knob); None = auto from the VMEM budget.
    compute_dtype: optional in-kernel cast (e.g. jnp.bfloat16) before the MXU
                   dot; None keeps the input precision (exact parity).
    """
    B, C, D = x.shape
    assert p.shape == (D,)
    M = B * C
    dtype = x.dtype
    itemsize = jnp.dtype(dtype).itemsize

    # Softmax(p) hoisted out of the kernel: same D-vector for every tile.
    w = jax.nn.softmax(p.astype(jnp.float32))

    # ---- choose packing ---------------------------------------------------
    # Pack R = floor(128/D) original rows per 128-lane vector row when D < 128
    # and the packing is a free, contiguous reshape (M % R == 0).
    R = 128 // D if D < 128 else 1
    if R < 2 or M % R != 0 or M == 0:
        R = 1
    L = R * D                 # kernel-view row length (lanes used per row)
    G = M // R                # kernel-view number of rows
    xv = x.reshape(G, L)      # free reshape (row-major contiguous), no copy

    # Weight matrix (R, L): row j carries w on lanes [j*D, (j+1)*D).
    if R == 1:
        wm = w.reshape(1, D)
    else:
        wm = (jnp.eye(R, dtype=jnp.float32)[:, :, None]
              * w[None, None, :]).reshape(R, L)
    wm = wm.astype(dtype)

    # ---- tile size: generation-aware VMEM budget --------------------------
    vmem_cap = _vmem_capacity_bytes()
    x_tile_budget = max(4 << 20, vmem_cap // 5)      # per buffer; x is double-buffered
    l_vmem = _round_up(L, 128)                       # lane-padded row footprint in VMEM
    if G < 128:
        tr = G                                       # block dim == full dim: always legal
    else:
        tr_cap = max(128, (x_tile_budget // (l_vmem * itemsize)) // 128 * 128)
        tr_cap = min(tr_cap, 16384)
        tr = min(tr_cap, _round_up(G, 128))
        if rows_per_tile is not None:
            tr = max(128, min(tr, (rows_per_tile // 128) * 128))
    grid = pl.cdiv(G, tr)                            # trailing block clipped by Pallas
    tile_bytes = tr * l_vmem * itemsize
    vmem_limit = _vmem_limit(tile_bytes, vmem_cap)

    kernel = functools.partial(_gem_heat_kernel, compute_dtype=compute_dtype)

    out = pl.pallas_call(
        kernel,
        out_shape=jax.ShapeDtypeStruct((R, G), dtype),
        grid=(grid,),
        in_specs=[
            pl.BlockSpec((R, L), lambda i: (0, 0)),      # weights: resident
            pl.BlockSpec((tr, L), lambda i: (i, 0)),     # x rows: streamed
        ],
        out_specs=pl.BlockSpec((R, tr), lambda i: (0, i)),   # lane-dense output
        compiler_params=pltpu.CompilerParams(
            dimension_semantics=("parallel",),
            vmem_limit_bytes=vmem_limit),
        cost_estimate=pl.CostEstimate(
            flops=2 * M * D,
            transcendentals=0,
            bytes_accessed=M * D * itemsize + M * itemsize + R * L * itemsize),
    )(wm, xv)

    if R == 1:
        y = out.reshape(M)
    else:
        # out[j, k] corresponds to original row m = k*R + j.
        y = out.T.reshape(M)       # tiny (R, G) transpose in the wrapper
    return y.reshape(B, C)


def gem_heat_reference(x, p):
    w = jax.nn.softmax(p.astype(jnp.float32))
    return jnp.einsum("bcd,d->bc", x.astype(jnp.float32), w).astype(x.dtype)


if __name__ == "__main__":
    key = jax.random.PRNGKey(0)
    ks = jax.random.split(key, 4)

    def check(x, p, **kw):
        y = jax.block_until_ready(gem_heat(x, p, **kw))
        y_ref = gem_heat_reference(x, p)
        assert y.shape == x.shape[:2], (y.shape, x.shape)
        assert jnp.allclose(y, y_ref, atol=1e-3, rtol=1e-3), (y, y_ref)

    # Case 1: toy shape, packed path (D=16 -> 8 rows per 128-lane vector row).
    B, C, dim = 2, 4, 16
    x = jax.random.normal(ks[0], (B, C, dim), dtype=jnp.float32)
    p_param = jnp.ones((dim,), dtype=jnp.float32) * 3.0   # __init__: ones(dim) * p
    check(x, p_param)

    # Case 2: module-default feature dim (dim=768 -> general lane-dense path).
    B, C, dim = 2, 4, 768
    x = jax.random.normal(ks[1], (B, C, dim), dtype=jnp.float32)
    p_param = jnp.ones((dim,), dtype=jnp.float32) * 3.0
    check(x, p_param)

    # Case 3: general path, multi-tile grid with a clipped trailing block
    # (M=600 rows, 256-row tiles -> grid 3, last block 88 valid rows, no padding).
    B, C, dim = 2, 300, 768
    x = jax.random.normal(ks[2], (B, C, dim), dtype=jnp.float32)
    p_param = jnp.ones((dim,), dtype=jnp.float32) * 3.0
    check(x, p_param, rows_per_tile=256)

    # Case 4: packed path, multi-tile grid with a clipped trailing block
    # (M=1600 -> 200 packed rows, 128-row tiles -> grid 2, last block 72 valid).
    B, C, dim = 8, 200, 16
    x = jax.random.normal(ks[3], (B, C, dim), dtype=jnp.float32)
    p_param = jnp.ones((dim,), dtype=jnp.float32) * 3.0
    check(x, p_param, rows_per_tile=128)

    print("KERNEL_OK")
</pallas_src>

<mosaic_0001>
module attributes {stable_mosaic.version = 11 : i64} {
  func.func @_gem_heat_kernel(%arg0: i32, %arg1: memref<8x128xf32, #tpu.memory_space<vmem>>, %arg2: memref<1x128xf32, #tpu.memory_space<vmem>>, %arg3: memref<8x1xf32, #tpu.memory_space<vmem>>) attributes {dimension_semantics = [#tpu.dimension_semantics<parallel>], iteration_bounds = array<i64: 1>, scalar_prefetch = 0 : i64, scratch_operands = 0 : i64, tpu.core_type = #tpu.core_type<tc>, window_params = [{pipeline_mode = #tpu.pipeline_mode<synchronous>, transform_indices = @transform_0, window_bounds = array<i64: 8, 128>}, {transform_indices = @transform_1, window_bounds = array<i64: 1, 128>}, {transform_indices = @transform_2, window_bounds = array<i64: 8, 1>}]} {
    %c0 = arith.constant 0 : index
    %c0_0 = arith.constant 0 : index
    %0 = vector.load %arg1[%c0, %c0_0] : memref<8x128xf32, #tpu.memory_space<vmem>>, vector<8x128xf32>
    %c0_1 = arith.constant 0 : index
    %c0_2 = arith.constant 0 : index
    %1 = vector.load %arg2[%c0_1, %c0_2] : memref<1x128xf32, #tpu.memory_space<vmem>>, vector<1x128xf32>
    %cst = arith.constant dense<0.000000e+00> : vector<8x1xf32>
    %2 = tpu.matmul %0, %1, %cst {dimension_numbers = #tpu.dot_dimension_numbers<[1], [1], [0], [0], [0, 0, 1, 0], [], []>} : vector<8x128xf32>, vector<1x128xf32>, vector<8x1xf32> -> vector<8x1xf32>
    %c0_3 = arith.constant 0 : index
    %c0_4 = arith.constant 0 : index
    %3 = vector.load %arg3[%c0_3, %c0_4] : memref<8x1xf32, #tpu.memory_space<vmem>>, vector<8x1xf32>
    tpu.vector_store %arg3[%c0_3, %c0_4], %2 {strides = array<i32>} : memref<8x1xf32, #tpu.memory_space<vmem>>, vector<8x1xf32>,
    return
  }
  func.func @transform_0(%arg0: i32) -> (i32, i32) {
    %c0_i32 = arith.constant 0 : i32
    %c0_i32_0 = arith.constant 0 : i32
    %c0_i32_1 = arith.constant 0 : i32
    return %c0_i32, %c0_i32_0 : i32, i32
  }
  func.func @transform_1(%arg0: i32) -> (i32, i32) {
    %c0_i32 = arith.constant 0 : i32
    %c0_i32_0 = arith.constant 0 : i32
    return %arg0, %c0_i32 : i32, i32
  }
  func.func @transform_2(%arg0: i32) -> (i32, i32) {
    %c0_i32 = arith.constant 0 : i32
    %c0_i32_0 = arith.constant 0 : i32
    return %c0_i32, %arg0 : i32, i32
  }
}

</mosaic_0001>

<llo_original>
// kernel: tpu_custom_call.1
$region0: #{tpu_custom_call.1}
  #allocation0 [shape = 'u32[]', space=smem, size = 0x4, offset = 0x4, fixed_abs, tag = 'smem constant byte address 0x4 - core index']
  #allocation1 [shape = 'u32[72,128]{1,0:T(1,128)}', space=vmem, size = 0x9000, scoped, tag = 'internal scratch']
  %s0 = inlined_call_operand.hbm [shape: f32[8,128], index: 0, kind: input, shape index: {}]
  %s1 = inlined_call_operand.hbm [shape: f32[1,128], index: 1, kind: input, shape index: {}]
  %s2 = inlined_call_operand.vmem [shape: f32[8,1], index: 2, kind: output, shape index: {}]
  %s3 = sld [smem:[#allocation0]]
  $region26: #{tpu_custom_call.1} parent=0
    _
  %s5 = ssub.s32 1, %s3
  %s6 = scalar_select 0, %s5, %s3
  $region1: #{tpu_custom_call.1} parent=0
    #allocation2 [shape = 'u8[4096]{0}', space=vmem, size = 0x1000, scoped, tag = 'input window, operand 0, single buffered']
    #allocation3 [shape = 's32[1]{0}', space=sflag, size = 0x4, scoped, tag = 'scoped memory for tpu_custom_call.1']
    #allocation4 [shape = 'u8[512]{0}', space=vmem, size = 0x400, scoped, tag = 'input window, operand 1, single buffered']
    #allocation5 [shape = 's32[1]{0}', space=sflag, size = 0x4, scoped, tag = 'scoped memory for tpu_custom_call.1']
    %7 = vsyncpa [#allocation3], 0
    %8 = vsyncpa [#allocation5], 0
    // Predicated region
    $region2: #{tpu_custom_call.1} parent=1 // pred_check
      _
    $region3: #{tpu_custom_call.1} parent=1 // pred_check_branch
      %10 = sbr.rel (0) target = $region5
    $region4: #{tpu_custom_call.1} parent=1 // pred_region
      %12 = vsyncadd [#allocation3], 0
      %s14 = sshll.u32 %s0, 4
      %s15 = int_to_ptr.hbm [resolvable:$true] %s14
      %s16 = sshll.u32 [#allocation2], 4
      %s17 = int_to_ptr.vmem [resolvable:$true] %s16
      %19 = dma.hbm_to_vmem [thread:$0]  %s15, 128, %s17, [#allocation3]
    $region5: #{tpu_custom_call.1} parent=1 // pred_fallthru
      _
    // Predicated region
    $region6: #{tpu_custom_call.1} parent=1 // pred_check
      _
    $region7: #{tpu_custom_call.1} parent=1 // pred_check_branch
      %21 = sbr.rel (0) target = $region9
    $region8: #{tpu_custom_call.1} parent=1 // pred_region
      %23 = vsyncadd [#allocation5], 0
      %s25 = sshll.u32 %s1, 4
      %s26 = int_to_ptr.hbm [resolvable:$true] %s25
      %s27 = sshll.u32 [#allocation4], 4
      %s28 = int_to_ptr.vmem [resolvable:$true] %s27
      %30 = dma.hbm_to_vmem [thread:$0]  %s26, 16, %s28, [#allocation5]
    $region9: #{tpu_custom_call.1} parent=1 // pred_fallthru
      _
    // Predicated region
    $region10: #{tpu_custom_call.1} parent=1 // pred_check
      _
    $region11: #{tpu_custom_call.1} parent=1 // pred_check_branch
      %32 = sbr.rel (0) target = $region13
    $region12: #{tpu_custom_call.1} parent=1 // pred_region
      %34 = dma.done [#allocation3], 128
    $region13: #{tpu_custom_call.1} parent=1 // pred_fallthru
      _
    // Predicated region
    $region14: #{tpu_custom_call.1} parent=1 // pred_check
      _
    $region15: #{tpu_custom_call.1} parent=1 // pred_check_branch
      %36 = sbr.rel (0) target = $region17
    $region16: #{tpu_custom_call.1} parent=1 // pred_region
      %38 = dma.done [#allocation5], 16
    $region17: #{tpu_custom_call.1} parent=1 // pred_fallthru
      _
    %v39 = vld [vmem:[#allocation2] sm:$0xff]
    %v40 = vld [vmem:[#allocation4] sm:$0x1]
    %v42 = vperm.slane %v40, 0
    %v44 = vmul.f32 %v39, %v42
    %45 = vadd.xlane.f32.xlu0 %v44
    %v46 = vpop.xlane.xlu0 %45
    %vm47 = vcmask 7168
    %48 = vst.msk [vmem:[%s2] sm:$0xff] %vm47, %v46
    // Predicated region
    $region18: #{tpu_custom_call.1} parent=1 // pred_check
      _
    $region19: #{tpu_custom_call.1} parent=1 // pred_check_branch
      %50 = sbr.rel (0) target = $region21
    $region20: #{tpu_custom_call.1} parent=1 // pred_region
      _
    $region21: #{tpu_custom_call.1} parent=1 // pred_fallthru
      _
    // Predicated region
    $region22: #{tpu_custom_call.1} parent=1 // pred_check
      _
    $region23: #{tpu_custom_call.1} parent=1 // pred_check_branch
      %52 = sbr.rel (0) target = $region25
    $region24: #{tpu_custom_call.1} parent=1 // pred_region
      _
    $region25: #{tpu_custom_call.1} parent=1 // pred_fallthru
      _
    %53 = vsyncpa [#allocation3], 1
    %54 = vsyncpa [#allocation5], 1

</llo_original>
